<compile_context>
chip_gen: v6e
topology: v6e:2x2x1
jax: 0.10.0
libtpu: 0.0.40
codegen_flags: <defaults>
</compile_context>

<pallas_src>
import functools

import numpy as np
import jax
import jax.numpy as jnp
from jax.experimental import pallas as pl
from jax.experimental.pallas import tpu as pltpu

# ---- configuration mirroring the PyTorch module's __init__ -------------------
NUM_SEM = 8                    # Tree.num_sem (not defined in the snippet; fixed here)
FEAT_LEN = 32
HIDDEN_LEN = 32
MAX_PART_PER_PARENT = 8
MAX_CHILDREN = MAX_PART_PER_PARENT
SYMMETRIC_TYPE = "max"         # 'max' | 'sum' | 'avg'
IN_LEN = FEAT_LEN + NUM_SEM + MAX_PART_PER_PARENT
NEG_SLOPE = 0.01               # F.leaky_relu default negative_slope
OUT_PAD = 128                  # lane-dense feature width (padded FEAT_LEN)
MIN_LEVEL_PAD = 8              # bucket floor for padded nodes-per-level (sublane multiple)


def _leaky_relu(x):
    return jnp.where(x > 0, x, NEG_SLOPE * x)


# ---- fused, level-batched whole-tree Pallas kernel ----------------------------
def _tree_encoder_kernel(dst_ref,                       # SMEM prefetch: scatter row per node
                         sg_ref, rs_ref,                # per-level streamed blocks
                         w1f_ref, w2_ref, b2_ref,       # VMEM-resident weights
                         o_ref,                         # (L_PAD, OUT_PAD) per-level output
                         tbl_ref,                       # persistent VMEM child-feature table
                         *, symmetric_type, l_pad):
    l = pl.program_id(0)

    # Zero the persistent table once: leaf-child slots / unused slots stay exactly 0.
    @pl.when(l == 0)
    def _():
        tbl_ref[...] = jnp.zeros_like(tbl_ref)

    rows = l_pad * MAX_CHILDREN
    row0 = pl.multiple_of(l * rows, rows)
    cf = tbl_ref[pl.ds(row0, rows), :]                  # (L*C, 128) child feats, lane-dense

    # child_op: concat([feat, sem_oh, grp_oh]) @ W1 + b1  ==  feat @ W1_feat + sg_bias.
    h = _leaky_relu(
        jnp.dot(cf, w1f_ref[...], preferred_element_type=jnp.float32) + sg_ref[...])
    h3 = h.reshape(l_pad, MAX_CHILDREN, HIDDEN_LEN)

    # Symmetric reduction over each node's child slots.
    if symmetric_type == "max":
        parent = jnp.max(h3, axis=1)                    # invalid slots hold ~-1e28: never win
    elif symmetric_type in ("sum", "avg"):
        parent = jnp.sum(h3, axis=1)                    # invalid slots contribute exactly 0
    else:
        raise ValueError(f"Unknown symmetric type: {symmetric_type}")
    parent = parent * rs_ref[...]                       # 1/num_children for 'avg', else 1

    # second: Linear(H, FEAT_LEN) + leaky_relu, lane-dense (w2/b2 zero-padded to 128 cols;
    # padded columns stay exactly 0 through leaky_relu).
    out = _leaky_relu(
        jnp.dot(parent, w2_ref[...], preferred_element_type=jnp.float32) + b2_ref[...])
    o_ref[...] = out                                    # one lane-dense (L_PAD, 128) store

    # Scatter each node's feature row into its parent's child slot (root / padded nodes go
    # to the dump row).  Destinations are SMEM scalars; each store is 128 lanes dense.
    base = l * l_pad
    for j in range(l_pad):                              # static, small, fully unrolled
        dst = dst_ref[base + j]
        tbl_ref[pl.ds(dst, 1), :] = out[j:j + 1, :]


@functools.partial(jax.jit, static_argnames=("symmetric_type", "l_pad"))
def _fused_tree_encode(dst, sem_flat, grp_flat, valid, inv_n,
                       w1, b1, w2, b2, *, symmetric_type, l_pad):
    """Encode all internal nodes of one tree in a single pallas_call.

    Returns (num_levels * l_pad, FEAT_LEN); row (level * l_pad + pos) is the feature of
    that internal node.  Rows of padded node slots contain garbage and are ignored.
    """
    nlp = dst.shape[0]                                  # num_levels * l_pad
    num_levels = nlp // l_pad
    rows_per_level = l_pad * MAX_CHILDREN

    # Split W1 along the concat order [child_feat | sem_onehot | group_onehot].
    w1f = w1[:FEAT_LEN]
    w1s = w1[FEAT_LEN:FEAT_LEN + NUM_SEM]
    w1g = w1[FEAT_LEN + NUM_SEM:]
    # 128-lane padded feature path (zero rows / columns stay zero through leaky_relu).
    w1f_pad = jnp.pad(w1f, ((0, OUT_PAD - FEAT_LEN), (0, 0)))
    w2_pad = jnp.pad(w2, ((0, 0), (0, OUT_PAD - FEAT_LEN)))
    b2_pad = jnp.pad(b2, ((0, 0), (0, OUT_PAD - FEAT_LEN)))

    # Precomputed per-(node, slot) bias: replaces the sem/grp one-hot matmuls in-kernel.
    sg = w1s[sem_flat] + w1g[grp_flat] + b1[0]          # (nlp*C, H) row gather
    invalid_fill = -1e30 if symmetric_type == "max" else 0.0
    sg = jnp.where(valid[:, None], sg, invalid_fill)

    if symmetric_type == "avg":
        rs = jnp.broadcast_to(inv_n[:, None], (nlp, HIDDEN_LEN)).astype(jnp.float32)
    else:
        rs = jnp.ones((nlp, HIDDEN_LEN), jnp.float32)

    kernel = functools.partial(_tree_encoder_kernel,
                               symmetric_type=symmetric_type, l_pad=l_pad)

    grid_spec = pltpu.PrefetchScalarGridSpec(
        num_scalar_prefetch=1,                          # dst -> SMEM
        grid=(num_levels,),
        in_specs=[
            pl.BlockSpec((rows_per_level, HIDDEN_LEN), lambda l, *_: (l, 0)),  # sg_bias
            pl.BlockSpec((l_pad, HIDDEN_LEN), lambda l, *_: (l, 0)),           # rscale
            pl.BlockSpec((OUT_PAD, HIDDEN_LEN), lambda l, *_: (0, 0)),         # w1f (resident)
            pl.BlockSpec((HIDDEN_LEN, OUT_PAD), lambda l, *_: (0, 0)),         # w2  (resident)
            pl.BlockSpec((1, OUT_PAD), lambda l, *_: (0, 0)),                  # b2  (resident)
        ],
        out_specs=pl.BlockSpec((l_pad, OUT_PAD), lambda l, *_: (l, 0)),
        scratch_shapes=[
            # Persistent child-feature table: one C-slot slab per (level, node position)
            # plus a dump slab for root / padded nodes.  128 lanes wide -> dense stores.
            pltpu.VMEM((nlp * MAX_CHILDREN + MAX_CHILDREN, OUT_PAD), jnp.float32),
        ],
    )
    out = pl.pallas_call(
        kernel,
        out_shape=jax.ShapeDtypeStruct((nlp, OUT_PAD), jnp.float32),
        grid_spec=grid_spec,
        # TODO(synk): levels are sequentially dependent through the VMEM table, so the
        # grid axis must stay "arbitrary"; splitting wide levels across the two v7x
        # TensorCores (VMEM_SHARED/CMEM table or per-level exchange) is not implemented.
        compiler_params=pltpu.CompilerParams(dimension_semantics=("arbitrary",)),
    )(dst, sg, rs, w1f_pad, w2_pad, b2_pad)
    return out[:, :FEAT_LEN]


# ---- deterministic parameter init (synthetic, no checkpoint) ------------------
def init_params(key):
    k1, k2, k3, k4 = jax.random.split(key, 4)
    w1 = jax.random.normal(k1, (IN_LEN, HIDDEN_LEN), jnp.float32) * 0.1    # child_op.weight^T
    b1 = jax.random.normal(k2, (1, HIDDEN_LEN), jnp.float32) * 0.1         # child_op.bias
    w2 = jax.random.normal(k3, (HIDDEN_LEN, FEAT_LEN), jnp.float32) * 0.1  # second.weight^T
    b2 = jax.random.normal(k4, (1, FEAT_LEN), jnp.float32) * 0.1           # second.bias
    return (w1, b1, w2, b2)


# ---- tree structure + host-side flattening ------------------------------------
class Node:
    def __init__(self, sem_idx, group_idx, children=()):
        self.sem_idx = sem_idx
        self.group_idx = group_idx
        self.children = list(children)
        self.template_feature = None

    def get_semantic_one_hot(self):
        return jax.nn.one_hot(self.sem_idx, NUM_SEM, dtype=jnp.float32).reshape(1, NUM_SEM)

    def get_group_ins_one_hot(self, max_part_per_parent):
        return jax.nn.one_hot(self.group_idx, max_part_per_parent,
                              dtype=jnp.float32).reshape(1, max_part_per_parent)


def _next_pow2(x):
    return 1 << (max(1, x) - 1).bit_length()


def _assign_levels(root):
    """Group internal nodes by level (0 = deepest, children strictly below parents)."""
    internal = []

    def post(n):
        lvl = -1
        for c in n.children:
            lvl = max(lvl, post(c))
        if n.children:
            n._level = lvl + 1
            internal.append(n)
            return n._level
        return -1

    post(root)
    if not internal:
        return []
    num_levels = max(n._level for n in internal) + 1
    by_level = [[] for _ in range(num_levels)]
    for n in internal:
        n._pos = len(by_level[n._level])
        by_level[n._level].append(n)
    return by_level


def _build_tables(by_level, l_pad):
    """Host-side (numpy) index tables describing the level-batched tree topology."""
    num_levels = len(by_level)
    nlp = num_levels * l_pad
    dump_row = nlp * MAX_CHILDREN                       # root & padded nodes scatter here
    dst = np.full((nlp,), dump_row, dtype=np.int32)
    sem = np.zeros((nlp * MAX_CHILDREN,), np.int32)
    grp = np.zeros((nlp * MAX_CHILDREN,), np.int32)
    valid = np.zeros((nlp * MAX_CHILDREN,), np.bool_)
    inv_n = np.ones((nlp,), np.float32)
    for lvl, nodes in enumerate(by_level):
        for pos, n in enumerate(nodes):
            # TODO(synk): nodes with more than MAX_PART_PER_PARENT children are not
            # supported by the fixed-slot fused kernel (host-side assert only).
            assert len(n.children) <= MAX_CHILDREN
            f = lvl * l_pad + pos
            n._flat = f
            inv_n[f] = 1.0 / len(n.children)
            for s, c in enumerate(n.children):
                idx = f * MAX_CHILDREN + s
                sem[idx] = c.sem_idx
                grp[idx] = c.group_idx
                valid[idx] = True
                if c.children:                          # internal child -> scatter target
                    dst[c._flat] = idx
    return dst, sem, grp, valid, inv_n


def template_encoder_forward(root, params, symmetric_type=SYMMETRIC_TYPE):
    """TemplateEncoder.forward: whole tree encoded with ONE level-batched pallas_call."""
    w1, b1, w2, b2 = params
    zero_feat = jnp.zeros((1, FEAT_LEN), jnp.float32)

    by_level = _assign_levels(root)
    if not by_level:                                    # root is a leaf
        root.template_feature = zero_feat
        return zero_feat

    max_width = max(len(nodes) for nodes in by_level)
    l_pad = max(MIN_LEVEL_PAD, _next_pow2(max_width))   # pow2 bucketing -> fewer recompiles

    dst, sem, grp, valid, inv_n = _build_tables(by_level, l_pad)
    feats = _fused_tree_encode(jnp.asarray(dst), jnp.asarray(sem), jnp.asarray(grp),
                               jnp.asarray(valid), jnp.asarray(inv_n),
                               w1, b1, w2, b2,
                               symmetric_type=symmetric_type, l_pad=l_pad)

    # Attribute assignment only (matches torch: every visited node gets template_feature).
    def assign(n):
        for c in n.children:
            assign(c)
        if n.children:
            n.template_feature = feats[n._flat][None, :]
        else:
            n.template_feature = zero_feat

    assign(root)
    return root.template_feature


# ---- pure-JAX reference mirroring the PyTorch recursion (correctness check) ---
def _ref_encode(node, params, symmetric_type):
    w1, b1, w2, b2 = params
    if len(node.children) == 0:
        return jnp.zeros((1, FEAT_LEN), jnp.float32)
    child_feats = []
    for c in node.children:
        cur = jnp.concatenate(
            [_ref_encode(c, params, symmetric_type),
             c.get_semantic_one_hot(),
             c.get_group_ins_one_hot(MAX_PART_PER_PARENT)], axis=1)
        child_feats.append(cur[:, None, :])
    x = jnp.concatenate(child_feats, axis=1)            # (1, num_children, IN_LEN)
    h = x @ w1 + b1
    h = jnp.where(h > 0, h, NEG_SLOPE * h)
    if symmetric_type == "max":
        p = jnp.max(h, axis=1)
    elif symmetric_type == "sum":
        p = jnp.sum(h, axis=1)
    else:
        p = jnp.mean(h, axis=1)
    o = p @ w2 + b2
    return jnp.where(o > 0, o, NEG_SLOPE * o)


if __name__ == "__main__":
    params = init_params(jax.random.PRNGKey(0))

    # Deterministic synthetic tree: 3 levels, mixed internal/leaf children, 4 internal nodes.
    leaves = [Node(sem_idx=k % NUM_SEM, group_idx=k % MAX_PART_PER_PARENT) for k in range(8)]
    n1 = Node(sem_idx=3, group_idx=2, children=[leaves[0], leaves[1]])
    n2 = Node(sem_idx=4, group_idx=5, children=[leaves[2], leaves[3], leaves[4]])
    n3 = Node(sem_idx=5, group_idx=1, children=[n1, n2, leaves[5]])
    root = Node(sem_idx=0, group_idx=0, children=[n3, leaves[6], leaves[7]])

    # Run the fused kernel for every symmetric type and check against the pure-JAX reference.
    for st in ("max", "sum", "avg"):
        root_feat = template_encoder_forward(root, params, symmetric_type=st)
        root_feat = jax.block_until_ready(root_feat)
        assert root_feat.shape == (1, FEAT_LEN)
        ref_root = _ref_encode(root, params, st)
        assert jnp.allclose(root_feat, ref_root, atol=1e-5, rtol=1e-5), f"root mismatch ({st})"
        # Also verify the internal-node features written by the fused kernel.
        for sub in (n1, n2, n3):
            ref_sub = _ref_encode(sub, params, st)
            assert jnp.allclose(sub.template_feature, ref_sub, atol=1e-5, rtol=1e-5), \
                f"internal node mismatch ({st})"

    print("KERNEL_OK")
</pallas_src>

<mosaic_0001>
module attributes {stable_mosaic.version = 11 : i64} {
  func.func @_tree_encoder_kernel(%arg0: i32, %arg1: memref<24xi32, #tpu.memory_space<smem>>, %arg2: memref<64x32xf32, #tpu.memory_space<vmem>>, %arg3: memref<8x32xf32, #tpu.memory_space<vmem>>, %arg4: memref<128x32xf32, #tpu.memory_space<vmem>>, %arg5: memref<32x128xf32, #tpu.memory_space<vmem>>, %arg6: memref<1x128xf32, #tpu.memory_space<vmem>>, %arg7: memref<8x128xf32, #tpu.memory_space<vmem>>, %arg8: memref<200x128xf32, #tpu.memory_space<vmem>>) attributes {dimension_semantics = [#tpu.dimension_semantics<arbitrary>], iteration_bounds = array<i64: 3>, scalar_prefetch = 1 : i64, scratch_operands = 1 : i64, tpu.core_type = #tpu.core_type<tc>, window_params = [{transform_indices = @transform_0, window_bounds = array<i64: 64, 32>}, {transform_indices = @transform_1, window_bounds = array<i64: 8, 32>}, {pipeline_mode = #tpu.pipeline_mode<synchronous>, transform_indices = @transform_2, window_bounds = array<i64: 128, 32>}, {pipeline_mode = #tpu.pipeline_mode<synchronous>, transform_indices = @transform_3, window_bounds = array<i64: 32, 128>}, {pipeline_mode = #tpu.pipeline_mode<synchronous>, transform_indices = @transform_4, window_bounds = array<i64: 1, 128>}, {transform_indices = @transform_5, window_bounds = array<i64: 8, 128>}]} {
    %c0_i32 = arith.constant 0 : i32
    %0 = arith.cmpi eq, %arg0, %c0_i32 : i32
    %1 = arith.extui %0 : i1 to i32
    %c0_i32_0 = arith.constant 0 : i32
    %2 = arith.cmpi ne, %1, %c0_i32_0 : i32
    scf.if %2 {
      %cst_28 = arith.constant 0.000000e+00 : f32
      %80 = vector.broadcast %cst_28 : f32 to vector<200x128xf32>
      %c0_29 = arith.constant 0 : index
      %c0_30 = arith.constant 0 : index
      %81 = vector.load %arg8[%c0_29, %c0_30] : memref<200x128xf32, #tpu.memory_space<vmem>>, vector<200x128xf32>
      tpu.vector_store %arg8[%c0_29, %c0_30], %80 {strides = array<i32>} : memref<200x128xf32, #tpu.memory_space<vmem>>, vector<200x128xf32>,
    } else {
    }
    %c64_i32 = arith.constant 64 : i32
    %3 = arith.muli %arg0, %c64_i32 : i32
    %4 = tpu.assume_multiple %3, 64 : i32
    %5 = arith.index_cast %4 : i32 to index
    %c0 = arith.constant 0 : index
    %6 = vector.load %arg8[%5, %c0] : memref<200x128xf32, #tpu.memory_space<vmem>>, vector<64x128xf32>
    %c0_1 = arith.constant 0 : index
    %c0_2 = arith.constant 0 : index
    %7 = vector.load %arg4[%c0_1, %c0_2] : memref<128x32xf32, #tpu.memory_space<vmem>>, vector<128x32xf32>
    %cst = arith.constant dense<0.000000e+00> : vector<64x32xf32>
    %8 = tpu.matmul %6, %7, %cst {dimension_numbers = #tpu.dot_dimension_numbers<[1], [0], [0], [1], [0, 0, 1, 1], [], []>} : vector<64x128xf32>, vector<128x32xf32>, vector<64x32xf32> -> vector<64x32xf32>
    %c0_3 = arith.constant 0 : index
    %c0_4 = arith.constant 0 : index
    %9 = vector.load %arg2[%c0_3, %c0_4] : memref<64x32xf32, #tpu.memory_space<vmem>>, vector<64x32xf32>
    %10 = arith.addf %8, %9 : vector<64x32xf32>
    %cst_5 = arith.constant 0.000000e+00 : f32
    %11 = vector.broadcast %cst_5 : f32 to vector<64x32xf32>
    %12 = arith.cmpf ogt, %10, %11 : vector<64x32xf32>
    %cst_6 = arith.constant 0.00999999977 : f32
    %13 = vector.broadcast %cst_6 : f32 to vector<64x32xf32>
    %14 = arith.mulf %13, %10 : vector<64x32xf32>
    %15 = arith.select %12, %10, %14 : vector<64x32xi1>, vector<64x32xf32>
    %16 = vector.shape_cast %15 : vector<64x32xf32> to vector<8x8x32xf32>
    %cst_7 = arith.constant dense<0xFF800000> : vector<8x32xf32>
    %17 = vector.multi_reduction <maximumf>, %16, %cst_7 [1] : vector<8x8x32xf32> to vector<8x32xf32>
    %c0_8 = arith.constant 0 : index
    %c0_9 = arith.constant 0 : index
    %18 = vector.load %arg3[%c0_8, %c0_9] : memref<8x32xf32, #tpu.memory_space<vmem>>, vector<8x32xf32>
    %19 = arith.mulf %17, %18 : vector<8x32xf32>
    %c0_10 = arith.constant 0 : index
    %c0_11 = arith.constant 0 : index
    %20 = vector.load %arg5[%c0_10, %c0_11] : memref<32x128xf32, #tpu.memory_space<vmem>>, vector<32x128xf32>
    %cst_12 = arith.constant dense<0.000000e+00> : vector<8x128xf32>
    %21 = tpu.matmul %19, %20, %cst_12 {dimension_numbers = #tpu.dot_dimension_numbers<[1], [0], [0], [1], [0, 0, 1, 1], [], []>} : vector<8x32xf32>, vector<32x128xf32>, vector<8x128xf32> -> vector<8x128xf32>
    %c0_13 = arith.constant 0 : index
    %c0_14 = arith.constant 0 : index
    %22 = vector.load %arg6[%c0_13, %c0_14] : memref<1x128xf32, #tpu.memory_space<vmem>>, vector<1x128xf32>
    %23 = vector.broadcast %22 : vector<1x128xf32> to vector<8x128xf32>
    %24 = arith.addf %21, %23 : vector<8x128xf32>
    %cst_15 = arith.constant 0.000000e+00 : f32
    %25 = vector.broadcast %cst_15 : f32 to vector<8x128xf32>
    %26 = arith.cmpf ogt, %24, %25 : vector<8x128xf32>
    %cst_16 = arith.constant 0.00999999977 : f32
    %27 = vector.broadcast %cst_16 : f32 to vector<8x128xf32>
    %28 = arith.mulf %27, %24 : vector<8x128xf32>
    %29 = arith.select %26, %24, %28 : vector<8x128xi1>, vector<8x128xf32>
    %c0_17 = arith.constant 0 : index
    %c0_18 = arith.constant 0 : index
    %30 = vector.load %arg7[%c0_17, %c0_18] : memref<8x128xf32, #tpu.memory_space<vmem>>, vector<8x128xf32>
    tpu.vector_store %arg7[%c0_17, %c0_18], %29 {strides = array<i32>} : memref<8x128xf32, #tpu.memory_space<vmem>>, vector<8x128xf32>,
    %c8_i32 = arith.constant 8 : i32
    %31 = arith.muli %arg0, %c8_i32 : i32
    %c0_i32_19 = arith.constant 0 : i32
    %32 = arith.addi %31, %c0_i32_19 : i32
    %33 = arith.index_cast %32 : i32 to index
    %34 = memref.load %arg1[%33] : memref<24xi32, #tpu.memory_space<smem>>
    %35 = vector.extract_strided_slice %29 {offsets = [0, 0], sizes = [1, 128], strides = [1, 1]} : vector<8x128xf32> to vector<1x128xf32>
    %36 = arith.index_cast %34 : i32 to index
    %c0_20 = arith.constant 0 : index
    %37 = vector.load %arg8[%36, %c0_20] : memref<200x128xf32, #tpu.memory_space<vmem>>, vector<1x128xf32>
    tpu.vector_store %arg8[%36, %c0_20], %35 {strides = array<i32>} : memref<200x128xf32, #tpu.memory_space<vmem>>, vector<1x128xf32>,
    %c1_i32 = arith.constant 1 : i32
    %38 = arith.addi %31, %c1_i32 : i32
    %39 = arith.index_cast %38 : i32 to index
    %40 = memref.load %arg1[%39] : memref<24xi32, #tpu.memory_space<smem>>
    %41 = vector.extract_strided_slice %29 {offsets = [1, 0], sizes = [1, 128], strides = [1, 1]} : vector<8x128xf32> to vector<1x128xf32>
    %42 = arith.index_cast %40 : i32 to index
    %c0_21 = arith.constant 0 : index
    %43 = vector.load %arg8[%42, %c0_21] : memref<200x128xf32, #tpu.memory_space<vmem>>, vector<1x128xf32>
    tpu.vector_store %arg8[%42, %c0_21], %41 {strides = array<i32>} : memref<200x128xf32, #tpu.memory_space<vmem>>, vector<1x128xf32>,
    %c2_i32 = arith.constant 2 : i32
    %44 = arith.addi %31, %c2_i32 : i32
    %45 = arith.index_cast %44 : i32 to index
    %46 = memref.load %arg1[%45] : memref<24xi32, #tpu.memory_space<smem>>
    %47 = vector.extract_strided_slice %29 {offsets = [2, 0], sizes = [1, 128], strides = [1, 1]} : vector<8x128xf32> to vector<1x128xf32>
    %48 = arith.index_cast %46 : i32 to index
    %c0_22 = arith.constant 0 : index
    %49 = vector.load %arg8[%48, %c0_22] : memref<200x128xf32, #tpu.memory_space<vmem>>, vector<1x128xf32>
    tpu.vector_store %arg8[%48, %c0_22], %47 {strides = array<i32>} : memref<200x128xf32, #tpu.memory_space<vmem>>, vector<1x128xf32>,
    %c3_i32 = arith.constant 3 : i32
    %50 = arith.addi %31, %c3_i32 : i32
    %51 = arith.index_cast %50 : i32 to index
    %52 = memref.load %arg1[%51] : memref<24xi32, #tpu.memory_space<smem>>
    %53 = vector.extract_strided_slice %29 {offsets = [3, 0], sizes = [1, 128], strides = [1, 1]} : vector<8x128xf32> to vector<1x128xf32>
    %54 = arith.index_cast %52 : i32 to index
    %c0_23 = arith.constant 0 : index
    %55 = vector.load %arg8[%54, %c0_23] : memref<200x128xf32, #tpu.memory_space<vmem>>, vector<1x128xf32>
    tpu.vector_store %arg8[%54, %c0_23], %53 {strides = array<i32>} : memref<200x128xf32, #tpu.memory_space<vmem>>, vector<1x128xf32>,
    %c4_i32 = arith.constant 4 : i32
    %56 = arith.addi %31, %c4_i32 : i32
    %57 = arith.index_cast %56 : i32 to index
    %58 = memref.load %arg1[%57] : memref<24xi32, #tpu.memory_space<smem>>
    %59 = vector.extract_strided_slice %29 {offsets = [4, 0], sizes = [1, 128], strides = [1, 1]} : vector<8x128xf32> to vector<1x128xf32>
    %60 = arith.index_cast %58 : i32 to index
    %c0_24 = arith.constant 0 : index
    %61 = vector.load %arg8[%60, %c0_24] : memref<200x128xf32, #tpu.memory_space<vmem>>, vector<1x128xf32>
    tpu.vector_store %arg8[%60, %c0_24], %59 {strides = array<i32>} : memref<200x128xf32, #tpu.memory_space<vmem>>, vector<1x128xf32>,
    %c5_i32 = arith.constant 5 : i32
    %62 = arith.addi %31, %c5_i32 : i32
    %63 = arith.index_cast %62 : i32 to index
    %64 = memref.load %arg1[%63] : memref<24xi32, #tpu.memory_space<smem>>
    %65 = vector.extract_strided_slice %29 {offsets = [5, 0], sizes = [1, 128], strides = [1, 1]} : vector<8x128xf32> to vector<1x128xf32>
    %66 = arith.index_cast %64 : i32 to index
    %c0_25 = arith.constant 0 : index
    %67 = vector.load %arg8[%66, %c0_25] : memref<200x128xf32, #tpu.memory_space<vmem>>, vector<1x128xf32>
    tpu.vector_store %arg8[%66, %c0_25], %65 {strides = array<i32>} : memref<200x128xf32, #tpu.memory_space<vmem>>, vector<1x128xf32>,
    %c6_i32 = arith.constant 6 : i32
    %68 = arith.addi %31, %c6_i32 : i32
    %69 = arith.index_cast %68 : i32 to index
    %70 = memref.load %arg1[%69] : memref<24xi32, #tpu.memory_space<smem>>
    %71 = vector.extract_strided_slice %29 {offsets = [6, 0], sizes = [1, 128], strides = [1, 1]} : vector<8x128xf32> to vector<1x128xf32>
    %72 = arith.index_cast %70 : i32 to index
    %c0_26 = arith.constant 0 : index
    %73 = vector.load %arg8[%72, %c0_26] : memref<200x128xf32, #tpu.memory_space<vmem>>, vector<1x128xf32>
    tpu.vector_store %arg8[%72, %c0_26], %71 {strides = array<i32>} : memref<200x128xf32, #tpu.memory_space<vmem>>, vector<1x128xf32>,
    %c7_i32 = arith.constant 7 : i32
    %74 = arith.addi %31, %c7_i32 : i32
    %75 = arith.index_cast %74 : i32 to index
    %76 = memref.load %arg1[%75] : memref<24xi32, #tpu.memory_space<smem>>
    %77 = vector.extract_strided_slice %29 {offsets = [7, 0], sizes = [1, 128], strides = [1, 1]} : vector<8x128xf32> to vector<1x128xf32>
    %78 = arith.index_cast %76 : i32 to index
    %c0_27 = arith.constant 0 : index
    %79 = vector.load %arg8[%78, %c0_27] : memref<200x128xf32, #tpu.memory_space<vmem>>, vector<1x128xf32>
    tpu.vector_store %arg8[%78, %c0_27], %77 {strides = array<i32>} : memref<200x128xf32, #tpu.memory_space<vmem>>, vector<1x128xf32>,
    return
  }
  func.func @transform_0(%arg0: i32, %arg1: memref<24xi32, #tpu.memory_space<smem>>) -> (i32, i32) {
    %c0_i32 = arith.constant 0 : i32
    %c0_i32_0 = arith.constant 0 : i32
    return %arg0, %c0_i32 : i32, i32
  }
  func.func @transform_1(%arg0: i32, %arg1: memref<24xi32, #tpu.memory_space<smem>>) -> (i32, i32) {
    %c0_i32 = arith.constant 0 : i32
    %c0_i32_0 = arith.constant 0 : i32
    return %arg0, %c0_i32 : i32, i32
  }
  func.func @transform_2(%arg0: i32, %arg1: memref<24xi32, #tpu.memory_space<smem>>) -> (i32, i32) {
    %c0_i32 = arith.constant 0 : i32
    %c0_i32_0 = arith.constant 0 : i32
    %c0_i32_1 = arith.constant 0 : i32
    return %c0_i32, %c0_i32_0 : i32, i32
  }
  func.func @transform_3(%arg0: i32, %arg1: memref<24xi32, #tpu.memory_space<smem>>) -> (i32, i32) {
    %c0_i32 = arith.constant 0 : i32
    %c0_i32_0 = arith.constant 0 : i32
    %c0_i32_1 = arith.constant 0 : i32
    return %c0_i32, %c0_i32_0 : i32, i32
  }
  func.func @transform_4(%arg0: i32, %arg1: memref<24xi32, #tpu.memory_space<smem>>) -> (i32, i32) {
    %c0_i32 = arith.constant 0 : i32
    %c0_i32_0 = arith.constant 0 : i32
    %c0_i32_1 = arith.constant 0 : i32
    return %c0_i32, %c0_i32_0 : i32, i32
  }
  func.func @transform_5(%arg0: i32, %arg1: memref<24xi32, #tpu.memory_space<smem>>) -> (i32, i32) {
    %c0_i32 = arith.constant 0 : i32
    %c0_i32_0 = arith.constant 0 : i32
    return %arg0, %c0_i32 : i32, i32
  }
}

</mosaic_0001>

<llo_original>
// kernel: _fused_tree_encode.1
$region0: #{_fused_tree_encode.1}
  #allocation0 [shape = 'u32[]', space=smem, size = 0x4, offset = 0x4, fixed_abs, tag = 'smem constant byte address 0x4 - core index']
  #allocation1 [shape = 'u32[144,128]{1,0:T(1,128)}', space=vmem, size = 0x12000, scoped, tag = 'internal scratch']
  #allocation2 [shape = 'f32[200,128]{1,0:T(8,128)}', space=vmem, size = 0x19000, scoped, tag = 'scratch operand']
  #allocation3 [shape = 's32[1]{0}', space=sflag, size = 0x4, scoped, tag = 'scoped memory for _fused_tree_encode.1']
  #allocation4 [shape = 'u8[512]{0}', space=smem, size = 0x200, scoped, tag = 'prefetched SMEM operand 0']
  %s0 = inlined_call_operand.vmem [shape: s32[24], index: 0, kind: input, shape index: {}]
  %s1 = inlined_call_operand.vmem [shape: f32[192,32], index: 1, kind: input, shape index: {}]
  %s2 = inlined_call_operand.vmem [shape: f32[24,32], index: 2, kind: input, shape index: {}]
  %s3 = inlined_call_operand.vmem [shape: f32[128,32], index: 3, kind: input, shape index: {}]
  %s4 = inlined_call_operand.vmem [shape: f32[32,128], index: 4, kind: input, shape index: {}]
  %s5 = inlined_call_operand.vmem [shape: f32[1,128], index: 5, kind: input, shape index: {}]
  %s6 = inlined_call_operand.hbm [shape: f32[24,128], index: 6, kind: output, shape index: {}]
  %s7 = sld [smem:[#allocation0]]
  $region57: #{_fused_tree_encode.1} parent=0
    _
  %s9 = ssub.s32 1, %s7
  %s10 = scalar_select 0, %s9, %s7
  %s11 = sshll.u32 %s0, 4
  %s12 = int_to_ptr.vmem [resolvable:$true] %s11
  %14 = dma.vmem_to_smem %s12, 16, [#allocation4], [#allocation3]
  %15 = dma.done [#allocation3], 16
  %16 = sfence
  $region1: #{_fused_tree_encode.1} parent=0
    #allocation5 [shape = 'u8[8192]{0}', space=vmem, size = 0x2000, scoped, tag = 'output window, operand 0']
    #allocation6 [shape = 's32[2]{0}', space=sflag, size = 0x8, scoped, tag = 'scoped memory for _fused_tree_encode.1']
    %17 = vsyncpa [#allocation6], 0
    %s18 = scalar_lea.sflag [#allocation6], 1
    %19 = vsyncpa %s18, 0
    loop: start=0, step=1, limit=5
    $region2: #{_fused_tree_encode.1} parent=1 // loop_pre_header
      _
    $region3: #{_fused_tree_encode.1} parent=1 // loop_header
      %s21 = sphi 0, %s25
      %p22 = scmp.ge.s32.totalorder %s21, 5
      %s31 = sphi 0, %s33
      %s34 = sphi 0, %s31
      %s35 = sphi 0, %s34
      %s51 = sphi 0, %s35
      %s57 = sphi 0, %s59
      %s60 = sphi 0, %s57
      %s61 = sphi 0, %s60
      %s77 = sphi 0, %s61
      %s81 = sphi 0, %s81
      %s83 = sphi 0, %s81
      %s84 = sphi 0, %s83
      %s98 = sphi 0, %s84
      %s102 = sphi 0, %s102
      %s104 = sphi 0, %s102
      %s105 = sphi 0, %s104
      %s119 = sphi 0, %s105
      %s123 = sphi 0, %s123
      %s125 = sphi 0, %s123
      %s126 = sphi 0, %s125
      %s140 = sphi 0, %s126
      %s146 = sphi 0, %s148
      %s149 = sphi 0, %s146
      %s150 = sphi 0, %s149
      %s166 = sphi 0, %s150
    $region4: #{_fused_tree_encode.1} parent=1 // loop_header_branch
      %24 = sbr.rel (%p22) target = $region8
    $region5: #{_fused_tree_encode.1} parent=1 // loop_body
      %s26 = ssub.s32 %s21, 1
      %s27 = ssub.s32 %s21, 2
      %s28 = sadd.s32 %s21, 1
      %s29 = ssub.s32 %s21, %s28
      %p30 = scmp.eq.s32.totalorder %s29, 0
      %s32 = sadd.s32 %s31, 1
      %s33 = scalar_select %p30, %s31, %s32
      %p36 = pneg %p30
      %p37 = scmp.eq.s32.totalorder %s21, 2
      %p38 = por %p36, %p37
      %p39 = scmp.ne.s32.totalorder %s31, %s34
      %p40 = scmp.eq.s32.totalorder %s21, 0
      %p41 = por %p39, %p40
      %p42 = scmp.ne.s32.totalorder %s31, %s34
      %p43 = scmp.eq.s32.totalorder %s26, 2
      %p44 = por %p42, %p43
      %p45 = scmp.ne.s32.totalorder %s34, %s35
      %p46 = scmp.eq.s32.totalorder %s26, 0
      %p47 = por %p45, %p46
      %p48 = scmp.ne.s32.totalorder %s34, %s35
      %p49 = scmp.eq.s32.totalorder %s27, 2
      %p50 = por %p48, %p49
      %p52 = scmp.ne.s32.totalorder %s35, %s51
      %p53 = scmp.eq.s32.totalorder %s27, 0
      %p54 = por %p52, %p53
      %s55 = ssub.s32 %s21, %s28
      %p56 = scmp.eq.s32.totalorder %s55, 0
      %s58 = sadd.s32 %s57, 1
      %s59 = scalar_select %p56, %s57, %s58
      %p62 = pneg %p56
      %p63 = scmp.eq.s32.totalorder %s21, 2
      %p64 = por %p62, %p63
      %p65 = scmp.ne.s32.totalorder %s57, %s60
      %p66 = scmp.eq.s32.totalorder %s21, 0
      %p67 = por %p65, %p66
      %p68 = scmp.ne.s32.totalorder %s57, %s60
      %p69 = scmp.eq.s32.totalorder %s26, 2
      %p70 = por %p68, %p69
      %p71 = scmp.ne.s32.totalorder %s60, %s61
      %p72 = scmp.eq.s32.totalorder %s26, 0
      %p73 = por %p71, %p72
      %p74 = scmp.ne.s32.totalorder %s60, %s61
      %p75 = scmp.eq.s32.totalorder %s27, 2
      %p76 = por %p74, %p75
      %p78 = scmp.ne.s32.totalorder %s61, %s77
      %p79 = scmp.eq.s32.totalorder %s27, 0
      %p80 = por %p78, %p79
      %s82 = sadd.s32 %s81, 1
      %p85 = scmp.eq.s32.totalorder %s21, 2
      %p86 = scmp.ne.s32.totalorder %s81, %s83
      %p87 = scmp.eq.s32.totalorder %s21, 0
      %p88 = por %p86, %p87
      %p89 = scmp.ne.s32.totalorder %s81, %s83
      %p90 = scmp.eq.s32.totalorder %s26, 2
      %p91 = por %p89, %p90
      %p92 = scmp.ne.s32.totalorder %s83, %s84
      %p93 = scmp.eq.s32.totalorder %s26, 0
      %p94 = por %p92, %p93
      %p95 = scmp.ne.s32.totalorder %s83, %s84
      %p96 = scmp.eq.s32.totalorder %s27, 2
      %p97 = por %p95, %p96
      %p99 = scmp.ne.s32.totalorder %s84, %s98
      %p100 = scmp.eq.s32.totalorder %s27, 0
      %p101 = por %p99, %p100
      %s103 = sadd.s32 %s102, 1
      %p106 = scmp.eq.s32.totalorder %s21, 2
      %p107 = scmp.ne.s32.totalorder %s102, %s104
      %p108 = scmp.eq.s32.totalorder %s21, 0
      %p109 = por %p107, %p108
      %p110 = scmp.ne.s32.totalorder %s102, %s104
      %p111 = scmp.eq.s32.totalorder %s26, 2
      %p112 = por %p110, %p111
      %p113 = scmp.ne.s32.totalorder %s104, %s105
      %p114 = scmp.eq.s32.totalorder %s26, 0
      %p115 = por %p113, %p114
      %p116 = scmp.ne.s32.totalorder %s104, %s105
      %p117 = scmp.eq.s32.totalorder %s27, 2
      %p118 = por %p116, %p117
      %p120 = scmp.ne.s32.totalorder %s105, %s119
      %p121 = scmp.eq.s32.totalorder %s27, 0
      %p122 = por %p120, %p121
      %s124 = sadd.s32 %s123, 1
      %p127 = scmp.eq.s32.totalorder %s21, 2
      %p128 = scmp.ne.s32.totalorder %s123, %s125
      %p129 = scmp.eq.s32.totalorder %s21, 0
      %p130 = por %p128, %p129
      %p131 = scmp.ne.s32.totalorder %s123, %s125
      %p132 = scmp.eq.s32.totalorder %s26, 2
      %p133 = por %p131, %p132
      %p134 = scmp.ne.s32.totalorder %s125, %s126
      %p135 = scmp.eq.s32.totalorder %s26, 0
      %p136 = por %p134, %p135
      %p137 = scmp.ne.s32.totalorder %s125, %s126
      %p138 = scmp.eq.s32.totalorder %s27, 2
      %p139 = por %p137, %p138
      %p141 = scmp.ne.s32.totalorder %s126, %s140
      %p142 = scmp.eq.s32.totalorder %s27, 0
      %p143 = por %p141, %p142
      %s144 = ssub.s32 %s21, %s28
      %p145 = scmp.eq.s32.totalorder %s144, 0
      %s147 = sadd.s32 %s146, 1
      %s148 = scalar_select %p145, %s146, %s147
      %p151 = pneg %p145
      %p152 = scmp.eq.s32.totalorder %s21, 2
      %p153 = por %p151, %p152
      %p154 = scmp.ne.s32.totalorder %s146, %s149
      %p155 = scmp.eq.s32.totalorder %s21, 0
      %p156 = por %p154, %p155
      %p157 = scmp.ne.s32.totalorder %s146, %s149
      %p158 = scmp.eq.s32.totalorder %s26, 2
      %p159 = por %p157, %p158
      %p160 = scmp.ne.s32.totalorder %s149, %s150
      %p161 = scmp.eq.s32.totalorder %s26, 0
      %p162 = por %p160, %p161
      %p163 = scmp.ne.s32.totalorder %s149, %s150
      %p164 = scmp.eq.s32.totalorder %s27, 2
      %p165 = por %p163, %p164
      %p167 = scmp.ne.s32.totalorder %s150, %s166
      %p168 = scmp.eq.s32.totalorder %s27, 0
      %p169 = por %p167, %p168
      %p170 = scmp.le.s32.totalorder 1, %s21
      %p171 = scmp.lt.s32.totalorder %s21, 4
      %p172 = pnand %p170, %p171
      %p173 = pneg %p172
      // Predicated region
      $region9: #{_fused_tree_encode.1} parent=5 // pred_check
        _
      $region10: #{_fused_tree_encode.1} parent=5 // pred_check_branch
        %175 = sbr.rel (%p172) target = $region12
      $region11: #{_fused_tree_encode.1} parent=5 // pred_region
        %s176 = ssub.s32 %s21, 1
        // Predicated region
        $region13: #{_fused_tree_encode.1} parent=11 // pred_check
          %p177 = pneg %p94
        $region14: #{_fused_tree_encode.1} parent=11 // pred_check_branch
          %179 = sbr.rel (%p177) target = $region16
        $region15: #{_fused_tree_encode.1} parent=11 // pred_region
          _
        $region16: #{_fused_tree_encode.1} parent=11 // pred_fallthru
          _
        // Predicated region
        $region17: #{_fused_tree_encode.1} parent=11 // pred_check
          %p180 = pneg %p115
        $region18: #{_fused_tree_encode.1} parent=11 // pred_check_branch
          %182 = sbr.rel (%p180) target = $region20
        $region19: #{_fused_tree_encode.1} parent=11 // pred_region
          _
        $region20: #{_fused_tree_encode.1} parent=11 // pred_fallthru
          _
        // Predicated region
        $region21: #{_fused_tree_encode.1} parent=11 // pred_check
          %p183 = pneg %p136
        $region22: #{_fused_tree_encode.1} parent=11 // pred_check_branch
          %185 = sbr.rel (%p183) target = $region24
        $region23: #{_fused_tree_encode.1} parent=11 // pred_region
          _
        $region24: #{_fused_tree_encode.1} parent=11 // pred_fallthru
          _
      $region12: #{_fused_tree_encode.1} parent=5 // pred_fallthru
        _
      %p186 = scmp.lt.s32.totalorder %s21, 3
      // Predicated region
      $region25: #{_fused_tree_encode.1} parent=5 // pred_check
        %p187 = pneg %p186
      $region26: #{_fused_tree_encode.1} parent=5 // pred_check_branch
        %189 = sbr.rel (%p187) target = $region28
      $region27: #{_fused_tree_encode.1} parent=5 // pred_region
        // Predicated region
        $region29: #{_fused_tree_encode.1} parent=27 // pred_check
          %p190 = pneg %p41
        $region30: #{_fused_tree_encode.1} parent=27 // pred_check_branch
          %192 = sbr.rel (%p190) target = $region32
        $region31: #{_fused_tree_encode.1} parent=27 // pred_region
          %s193 = smul.u32 8, %s21
          %p194 = scmp.lt.s32.totalorder %s193, 23
          %s195 = scalar_select %p194, %s193, 23
          %s196 = smul.addr %s195, 8
          %s197 = scalar_lea.vmem %s1, %s196
          %s198 = smul.u32 8, %s21
        $region32: #{_fused_tree_encode.1} parent=27 // pred_fallthru
          _
        // Predicated region
        $region33: #{_fused_tree_encode.1} parent=27 // pred_check
          %p199 = pneg %p67
        $region34: #{_fused_tree_encode.1} parent=27 // pred_check_branch
          %201 = sbr.rel (%p199) target = $region36
        $region35: #{_fused_tree_encode.1} parent=27 // pred_region
          %p202 = scmp.lt.s32.totalorder %s21, 2
          %s203 = scalar_select %p202, %s21, 2
          %s204 = smul.addr %s203, 8
          %s205 = scalar_lea.vmem %s2, %s204
        $region36: #{_fused_tree_encode.1} parent=27 // pred_fallthru
          _
      $region28: #{_fused_tree_encode.1} parent=5 // pred_fallthru
        _
      %p206 = scmp.le.s32.totalorder 1, %s21
      %p207 = scmp.lt.s32.totalorder %s21, 4
      %p208 = pnand %p206, %p207
      %p209 = pneg %p208
      // Predicated region
      $region37: #{_fused_tree_encode.1} parent=5 // pred_check
        _
      $region38: #{_fused_tree_encode.1} parent=5 // pred_check_branch
        %211 = sbr.rel (%p208) target = $region40
      $region39: #{_fused_tree_encode.1} parent=5 // pred_region
        %s212 = ssub.s32 %s21, 1
        %s213 = smul.u32 8, %s26
        %p214 = scmp.lt.s32.totalorder %s213, 23
        %s215 = scalar_select %p214, %s213, 23
        %s216 = smul.addr %s215, 8
        %s217 = scalar_lea.vmem %s1, %s216
        %p218 = pneg %p47
        %p219 = pneg %p44
        %p220 = scmp.lt.s32.totalorder %s26, 2
        %s221 = scalar_select %p220, %s26, 2
        %s222 = smul.addr %s221, 8
        %s223 = scalar_lea.vmem %s2, %s222
        %p224 = pneg %p73
        %p225 = pneg %p70
        %p226 = pneg %p94
        %p227 = pneg %p91
        %p228 = pneg %p115
        %p229 = pneg %p112
        %p230 = pneg %p136
        %p231 = pneg %p133
        %p232 = pneg %p162
        %p233 = pneg %p159
        %s234 = sand.u32 %s149, 1
        %s235 = scalar_lea.sflag [#allocation6], %s234
        %s236 = sand.u32 %s149, 1
        %s237 = smul.addr %s236, 8
        %s238 = scalar_lea.vmem [#allocation5], %s237
        %s239 = smul.u32 8, %s26
        %p240 = scmp.lt.s32.totalorder %s239, 23
        %s241 = scalar_select %p240, %s239, 23
        %s242 = smul.addr %s241, 8
        %s243 = scalar_lea.vmem %s1, %s242
        %s244 = smul.u32 8, %s26
        %p245 = scmp.lt.s32.totalorder %s26, 2
        %s246 = scalar_select %p245, %s26, 2
        %s247 = smul.addr %s246, 8
        %s248 = scalar_lea.vmem %s2, %s247
        %p249 = scmp.eq.s32.totalorder %s26, 0
        // Predicated region
        $region41: #{_fused_tree_encode.1} parent=39 // pred_check
          %p250 = pneg %p249
        $region42: #{_fused_tree_encode.1} parent=39 // pred_check_branch
          %252 = sbr.rel (%p250) target = $region44
        $region43: #{_fused_tree_encode.1} parent=39 // pred_region
          %253 = vst [vmem:[#allocation2] sm:$0xff] 0.0
          %254 = vst [vmem:[#allocation2 + $0x8] sm:$0xff] 0.0
          %255 = vst [vmem:[#allocation2 + $0x10] sm:$0xff] 0.0
          %256 = vst [vmem:[#allocation2 + $0x18] sm:$0xff] 0.0
          %257 = vst [vmem:[#allocation2 + $0x20] sm:$0xff] 0.0
          %258 = vst [vmem:[#allocation2 + $0x28] sm:$0xff] 0.0
          %259 = vst [vmem:[#allocation2 + $0x30] sm:$0xff] 0.0
          %260 = vst [vmem:[#allocation2 + $0x38] sm:$0xff] 0.0
          %261 = vst [vmem:[#allocation2 + $0x40] sm:$0xff] 0.0
          %262 = vst [vmem:[#allocation2 + $0x48] sm:$0xff] 0.0
          %263 = vst [vmem:[#allocation2 + $0x50] sm:$0xff] 0.0
          %264 = vst [vmem:[#allocation2 + $0x58] sm:$0xff] 0.0
          %265 = vst [vmem:[#allocation2 + $0x60] sm:$0xff] 0.0
          %266 = vst [vmem:[#allocation2 + $0x68] sm:$0xff] 0.0
          %267 = vst [vmem:[#allocation2 + $0x70] sm:$0xff] 0.0
          %268 = vst [vmem:[#allocation2 + $0x78] sm:$0xff] 0.0
          %269 = vst [vmem:[#allocation2 + $0x80] sm:$0xff] 0.0
          %270 = vst [vmem:[#allocation2 + $0x88] sm:$0xff] 0.0
          %271 = vst [vmem:[#allocation2 + $0x90] sm:$0xff] 0.0
          %272 = vst [vmem:[#allocation2 + $0x98] sm:$0xff] 0.0
          %273 = vst [vmem:[#allocation2 + $0xa0] sm:$0xff] 0.0
          %274 = vst [vmem:[#allocation2 + $0xa8] sm:$0xff] 0.0
          %275 = vst [vmem:[#allocation2 + $0xb0] sm:$0xff] 0.0
          %276 = vst [vmem:[#allocation2 + $0xb8] sm:$0xff] 0.0
          %277 = vst [vmem:[#allocation2 + $0xc0] sm:$0xff] 0.0
        $region44: #{_fused_tree_encode.1} parent=39 // pred_fallthru
          _
        %s278 = smul.u32 %s26, 64
        %s279 = scalar_lea.vmem [#allocation2], %s278
        %v280 = vld [vmem:[%s279] sm:$0xff]
        %v281 = vld [vmem:[%s279 + $0x8] sm:$0xff]
        %v282 = vld [vmem:[%s279 + $0x10] sm:$0xff]
        %v283 = vld [vmem:[%s279 + $0x18] sm:$0xff]
        %v284 = vld [vmem:[%s279 + $0x20] sm:$0xff]
        %v285 = vld [vmem:[%s279 + $0x28] sm:$0xff]
        %v286 = vld [vmem:[%s279 + $0x30] sm:$0xff]
        %v287 = vld [vmem:[%s279 + $0x38] sm:$0xff]
        %v288 = vld [vmem:[%s3] sm:$0xff]
        %v289 = vld [vmem:[%s3 + $0x8] sm:$0xff]
        %v290 = vld [vmem:[%s3 + $0x10] sm:$0xff]
        %v291 = vld [vmem:[%s3 + $0x18] sm:$0xff]
        %v292 = vld [vmem:[%s3 + $0x20] sm:$0xff]
        %v293 = vld [vmem:[%s3 + $0x28] sm:$0xff]
        %v294 = vld [vmem:[%s3 + $0x30] sm:$0xff]
        %v295 = vld [vmem:[%s3 + $0x38] sm:$0xff]
        %v296 = vld [vmem:[%s3 + $0x40] sm:$0xff]
        %v297 = vld [vmem:[%s3 + $0x48] sm:$0xff]
        %v298 = vld [vmem:[%s3 + $0x50] sm:$0xff]
        %v299 = vld [vmem:[%s3 + $0x58] sm:$0xff]
        %v300 = vld [vmem:[%s3 + $0x60] sm:$0xff]
        %v301 = vld [vmem:[%s3 + $0x68] sm:$0xff]
        %v302 = vld [vmem:[%s3 + $0x70] sm:$0xff]
        %v303 = vld [vmem:[%s3 + $0x78] sm:$0xff]
        %v304 = vld [vmem:[%s243] sm:$0xff]
        %v305 = vld [vmem:[%s243 + $0x8] sm:$0xff]
        %v306 = vld [vmem:[%s243 + $0x10] sm:$0xff]
        %v307 = vld [vmem:[%s243 + $0x18] sm:$0xff]
        %v308 = vld [vmem:[%s243 + $0x20] sm:$0xff]
        %v309 = vld [vmem:[%s243 + $0x28] sm:$0xff]
        %v310 = vld [vmem:[%s243 + $0x30] sm:$0xff]
        %v311 = vld [vmem:[%s243 + $0x38] sm:$0xff]
        %312 = vmatprep.subr.mxu0 0.0
        %313 = vmatpush1.msra.mxu0 %v303
        %314 = vmatprep.subr.mxu0 0.0
        %315 = vmatpush1.msra.mxu0 %v302
        %316 = vmatprep.subr.mxu0 0.0
        %317 = vmatpush1.msra.mxu0 %v301
        %318 = vmatprep.subr.mxu0 0.0
        %319 = vmatpush1.msra.mxu0 %v300
        %320 = vmatprep.subr.mxu0 0.0
        %321 = vmatpush1.msra.mxu0 %v299
        %322 = vmatprep.subr.mxu0 0.0
        %323 = vmatpush1.msra.mxu0 %v298
        %324 = vmatprep.subr.mxu0 0.0
        %325 = vmatpush1.msra.mxu0 %v297
        %326 = vmatprep.subr.mxu0 0.0
        %327 = vmatpush1.msra.mxu0 %v296
        %328 = vmatprep.subr.mxu0 0.0
        %329 = vmatpush1.msra.mxu0 %v295
        %330 = vmatprep.subr.mxu0 0.0
        %331 = vmatpush1.msra.mxu0 %v294
        %332 = vmatprep.subr.mxu0 0.0
        %333 = vmatpush1.msra.mxu0 %v293
        %334 = vmatprep.subr.mxu0 0.0
        %335 = vmatpush1.msra.mxu0 %v292
        %336 = vmatprep.subr.mxu0 0.0
        %337 = vmatpush1.msra.mxu0 %v291
        %338 = vmatprep.subr.mxu0 0.0
        %339 = vmatpush1.msra.mxu0 %v290
        %340 = vmatprep.subr.mxu0 0.0
        %341 = vmatpush1.msra.mxu0 %v289
        %342 = vmatprep.subr.mxu0 0.0
        %343 = vmatpush1.msra.mxu0 %v288
        %344 = vmatprep.subr.mxu0 0.0
        %345 = vmatpush2.msra.mxu0 0.0
        %346 = vmatprep.subr.mxu0 0.0
        %347 = vmatpush2.msra.mxu0 0.0
        %348 = vmatprep.subr.mxu0 0.0
        %349 = vmatpush2.msra.mxu0 0.0
        %350 = vmatprep.subr.mxu0 0.0
        %351 = vmatpush2.msra.mxu0 0.0
        %352 = vmatprep.subr.mxu0 0.0
        %353 = vmatpush2.msra.mxu0 0.0
        %354 = vmatprep.subr.mxu0 0.0
        %355 = vmatpush2.msra.mxu0 0.0
        %356 = vmatprep.subr.mxu0 0.0
        %357 = vmatpush2.msra.mxu0 0.0
        %358 = vmatprep.subr.mxu0 0.0
        %359 = vmatpush2.msra.mxu0 0.0
        %360 = vmatprep.subr.mxu0 0.0
        %361 = vmatpush2.msra.mxu0 0.0
        %362 = vmatprep.subr.mxu0 0.0
        %363 = vmatpush2.msra.mxu0 0.0
        %364 = vmatprep.subr.mxu0 0.0
        %365 = vmatpush2.msra.mxu0 0.0
        %366 = vmatprep.subr.mxu0 0.0
        %367 = vmatpush2.msra.mxu0 0.0
        %368 = vmatprep.subr.mxu0 0.0
        %369 = vmatpush2.msra.mxu0 0.0
        %370 = vmatprep.subr.mxu0 0.0
        %371 = vmatpush2.msra.mxu0 0.0
        %372 = vmatprep.subr.mxu0 0.0
        %373 = vmatpush2.msra.mxu0 0.0
        %374 = vmatprep.subr.mxu0 0.0
        %375 = vmatpush2.msra.mxu0 0.0
        %376 = vmatprep.mubr.f32.mxu0 0.0
        %377 = vmatmul.mubr.f32.gmra.mxu0 %v280
        %v378 = vpop.f32.mrf.mxu0
        %v379 = vadd.f32 %v304, %v378
        %v380 = vpop.f32.mrf.mxu0
        %381 = vmatprep.mubr.f32.mxu0 0.0
        %382 = vmatmul.mubr.f32.gmra.mxu0 %v281
        %v383 = vpop.f32.mrf.mxu0
        %v384 = vadd.f32 %v305, %v383
        %v385 = vpop.f32.mrf.mxu0
        %386 = vmatprep.mubr.f32.mxu0 0.0
        %387 = vmatmul.mubr.f32.gmra.mxu0 %v282
        %v388 = vpop.f32.mrf.mxu0
        %v389 = vadd.f32 %v306, %v388
        %v390 = vpop.f32.mrf.mxu0
        %391 = vmatprep.mubr.f32.mxu0 0.0
        %392 = vmatmul.mubr.f32.gmra.mxu0 %v283
        %v393 = vpop.f32.mrf.mxu0
        %v394 = vadd.f32 %v307, %v393
        %v395 = vpop.f32.mrf.mxu0
        %396 = vmatprep.mubr.f32.mxu0 0.0
        %397 = vmatmul.mubr.f32.gmra.mxu0 %v284
        %v398 = vpop.f32.mrf.mxu0
        %v399 = vadd.f32 %v308, %v398
        %v400 = vpop.f32.mrf.mxu0
        %401 = vmatprep.mubr.f32.mxu0 0.0
        %402 = vmatmul.mubr.f32.gmra.mxu0 %v285
        %v403 = vpop.f32.mrf.mxu0
        %v404 = vadd.f32 %v309, %v403
        %v405 = vpop.f32.mrf.mxu0
        %406 = vmatprep.mubr.f32.mxu0 0.0
        %407 = vmatmul.mubr.f32.gmra.mxu0 %v286
        %v408 = vpop.f32.mrf.mxu0
        %v409 = vadd.f32 %v310, %v408
        %v410 = vpop.f32.mrf.mxu0
        %411 = vmatprep.mubr.f32.mxu0 0.0
        %412 = vmatmul.mubr.f32.gmra.mxu0 %v287
        %v413 = vpop.f32.mrf.mxu0
        %v414 = vadd.f32 %v311, %v413
        %v415 = vpop.f32.mrf.mxu0
        %416 = vdwg.mxu0
        %vm417 = vcmp.gt.f32.partialorder %v379, 0.0
        %vm418 = vcmp.gt.f32.partialorder %v384, 0.0
        %vm419 = vcmp.gt.f32.partialorder %v389, 0.0
        %vm420 = vcmp.gt.f32.partialorder %v394, 0.0
        %vm421 = vcmp.gt.f32.partialorder %v399, 0.0
        %vm422 = vcmp.gt.f32.partialorder %v404, 0.0
        %vm423 = vcmp.gt.f32.partialorder %v409, 0.0
        %vm424 = vcmp.gt.f32.partialorder %v414, 0.0
        %v425 = vmul.f32 %v379, 0.01
        %v426 = vmul.f32 %v384, 0.01
        %v427 = vmul.f32 %v389, 0.01
        %v428 = vmul.f32 %v394, 0.01
        %v429 = vmul.f32 %v399, 0.01
        %v430 = vmul.f32 %v404, 0.01
        %v431 = vmul.f32 %v409, 0.01
        %v432 = vmul.f32 %v414, 0.01
        %v433 = vsel %vm417, %v379, %v425
        %v434 = vsel %vm418, %v384, %v426
        %v435 = vsel %vm419, %v389, %v427
        %v436 = vsel %vm420, %v394, %v428
        %v437 = vsel %vm421, %v399, %v429
        %v438 = vsel %vm422, %v404, %v430
        %v439 = vsel %vm423, %v409, %v431
        %v440 = vsel %vm424, %v414, %v432
        %vm441 = vcmask 261120
        %v442 = vsel %vm441, %v433, -inf
        %v443 = vrot.slane %v442, 4
        %v444 = vmax.f32 %v442, %v443
        %v445 = vrot.slane %v444, 2
        %v446 = vmax.f32 %v444, %v445
        %v447 = vrot.slane %v446, 1
        %v448 = vmax.f32 %v446, %v447
        %v449 = vsel %vm441, %v434, -inf
        %v450 = vrot.slane %v449, 4
        %v451 = vmax.f32 %v449, %v450
        %v452 = vrot.slane %v451, 2
        %v453 = vmax.f32 %v451, %v452
        %v454 = vrot.slane %v453, 1
        %v455 = vmax.f32 %v453, %v454
        %v456 = vsel %vm441, %v435, -inf
        %v457 = vrot.slane %v456, 4
        %v458 = vmax.f32 %v456, %v457
        %v459 = vrot.slane %v458, 2
        %v460 = vmax.f32 %v458, %v459
        %v461 = vrot.slane %v460, 1
        %v462 = vmax.f32 %v460, %v461
        %v463 = vsel %vm441, %v436, -inf
        %v464 = vrot.slane %v463, 4
        %v465 = vmax.f32 %v463, %v464
        %v466 = vrot.slane %v465, 2
        %v467 = vmax.f32 %v465, %v466
        %v468 = vrot.slane %v467, 1
        %v469 = vmax.f32 %v467, %v468
        %v470 = vsel %vm441, %v437, -inf
        %v471 = vrot.slane %v470, 4
        %v472 = vmax.f32 %v470, %v471
        %v473 = vrot.slane %v472, 2
        %v474 = vmax.f32 %v472, %v473
        %v475 = vrot.slane %v474, 1
        %v476 = vmax.f32 %v474, %v475
        %v477 = vsel %vm441, %v438, -inf
        %v478 = vrot.slane %v477, 4
        %v479 = vmax.f32 %v477, %v478
        %v480 = vrot.slane %v479, 2
        %v481 = vmax.f32 %v479, %v480
        %v482 = vrot.slane %v481, 1
        %v483 = vmax.f32 %v481, %v482
        %v484 = vsel %vm441, %v439, -inf
        %v485 = vrot.slane %v484, 4
        %v486 = vmax.f32 %v484, %v485
        %v487 = vrot.slane %v486, 2
        %v488 = vmax.f32 %v486, %v487
        %v489 = vrot.slane %v488, 1
        %v490 = vmax.f32 %v488, %v489
        %v491 = vsel %vm441, %v440, -inf
        %v492 = vrot.slane %v491, 4
        %v493 = vmax.f32 %v491, %v492
        %v494 = vrot.slane %v493, 2
        %v495 = vmax.f32 %v493, %v494
        %v496 = vrot.slane %v495, 1
        %v497 = vmax.f32 %v495, %v496
        %v498 = vld [vmem:[%s248] sm:$0xff]
        %v500 = vrot.slane %v498, 1
        %v501 = vrot.slane %v498, 2
        %v502 = vrot.slane %v498, 3
        %v503 = vrot.slane %v498, 4
        %v504 = vrot.slane %v498, 5
        %v505 = vrot.slane %v498, 6
        %v506 = vrot.slane %v498, 7
        %v515 = vmul.f32 %v448, %v498
        %v516 = vmul.f32 %v455, %v500
        %v517 = vmul.f32 %v462, %v501
        %v518 = vmul.f32 %v469, %v502
        %v519 = vmul.f32 %v476, %v503
        %v520 = vmul.f32 %v483, %v504
        %v521 = vmul.f32 %v490, %v505
        %v522 = vmul.f32 %v497, %v506
        %v523 = vld [vmem:[%s4] sm:$0xff]
        %v524 = vld [vmem:[%s4 + $0x8] sm:$0xff]
        %v525 = vld [vmem:[%s4 + $0x10] sm:$0xff]
        %v526 = vld [vmem:[%s4 + $0x18] sm:$0xff]
        %v527 = vld [vmem:[%s5] sm:$0x1]
        %v529 = vlaneseq
        %v530 = vshrl.u32 %v529, 7
        %v531 = vsub.s32 0, %v530
        %v532 = vrot.slane %v527, %v531
        %v542 = vrot.slane %v516, 7
        %vm543 = vcmask 1041409
        %v544 = vsel %vm543, %v542, %v515
        %v545 = vrot.slane %v517, 6
        %vm546 = vcmask 1042434
        %v547 = vsel %vm546, %v545, %v544
        %v548 = vrot.slane %v518, 5
        %vm549 = vcmask 1043459
        %v550 = vsel %vm549, %v548, %v547
        %v551 = vrot.slane %v519, 4
        %vm552 = vcmask 1044484
        %v553 = vsel %vm552, %v551, %v550
        %v554 = vrot.slane %v520, 3
        %vm555 = vcmask 1045509
        %v556 = vsel %vm555, %v554, %v553
        %v557 = vrot.slane %v521, 2
        %vm558 = vcmask 1046534
        %v559 = vsel %vm558, %v557, %v556
        %v560 = vrot.slane %v522, 1
        %vm561 = vcmask 1047559
        %v562 = vsel %vm561, %v560, %v559
        %v563 = vsel %vm441, %v562, 0
        %565 = vmatprep.subr.mxu0 0.0
        %566 = vmatpush1.msra.mxu0 0.0
        %567 = vmatprep.subr.mxu0 0.0
        %568 = vmatpush1.msra.mxu0 0.0
        %569 = vmatprep.subr.mxu0 0.0
        %570 = vmatpush1.msra.mxu0 0.0
        %571 = vmatprep.subr.mxu0 0.0
        %572 = vmatpush1.msra.mxu0 0.0
        %573 = vmatprep.subr.mxu0 0.0
        %574 = vmatpush1.msra.mxu0 0.0
        %575 = vmatprep.subr.mxu0 0.0
        %576 = vmatpush1.msra.mxu0 0.0
        %577 = vmatprep.subr.mxu0 0.0
        %578 = vmatpush1.msra.mxu0 0.0
        %579 = vmatprep.subr.mxu0 0.0
        %580 = vmatpush1.msra.mxu0 0.0
        %581 = vmatprep.subr.mxu0 0.0
        %582 = vmatpush1.msra.mxu0 0.0
        %583 = vmatprep.subr.mxu0 0.0
        %584 = vmatpush1.msra.mxu0 0.0
        %585 = vmatprep.subr.mxu0 0.0
        %586 = vmatpush1.msra.mxu0 0.0
        %587 = vmatprep.subr.mxu0 0.0
        %588 = vmatpush1.msra.mxu0 0.0
        %589 = vmatprep.subr.mxu0 0.0
        %590 = vmatpush1.msra.mxu0 %v526
        %591 = vmatprep.subr.mxu0 0.0
        %592 = vmatpush1.msra.mxu0 %v525
        %593 = vmatprep.subr.mxu0 0.0
        %594 = vmatpush1.msra.mxu0 %v524
        %595 = vmatprep.subr.mxu0 0.0
        %596 = vmatpush1.msra.mxu0 %v523
        %597 = vmatprep.subr.mxu0 0.0
        %598 = vmatpush2.msra.mxu0 0.0
        %599 = vmatprep.subr.mxu0 0.0
        %600 = vmatpush2.msra.mxu0 0.0
        %601 = vmatprep.subr.mxu0 0.0
        %602 = vmatpush2.msra.mxu0 0.0
        %603 = vmatprep.subr.mxu0 0.0
        %604 = vmatpush2.msra.mxu0 0.0
        %605 = vmatprep.subr.mxu0 0.0
        %606 = vmatpush2.msra.mxu0 0.0
        %607 = vmatprep.subr.mxu0 0.0
        %608 = vmatpush2.msra.mxu0 0.0
        %609 = vmatprep.subr.mxu0 0.0
        %610 = vmatpush2.msra.mxu0 0.0
        %611 = vmatprep.subr.mxu0 0.0
        %612 = vmatpush2.msra.mxu0 0.0
        %613 = vmatprep.subr.mxu0 0.0
        %614 = vmatpush2.msra.mxu0 0.0
        %615 = vmatprep.subr.mxu0 0.0
        %616 = vmatpush2.msra.mxu0 0.0
        %617 = vmatprep.subr.mxu0 0.0
        %618 = vmatpush2.msra.mxu0 0.0
        %619 = vmatprep.subr.mxu0 0.0
        %620 = vmatpush2.msra.mxu0 0.0
        %621 = vmatprep.subr.mxu0 0.0
        %622 = vmatpush2.msra.mxu0 0.0
        %623 = vmatprep.subr.mxu0 0.0
        %624 = vmatpush2.msra.mxu0 0.0
        %625 = vmatprep.subr.mxu0 0.0
        %626 = vmatpush2.msra.mxu0 0.0
        %627 = vmatprep.subr.mxu0 0.0
        %628 = vmatpush2.msra.mxu0 0.0
        %629 = vmatprep.mubr.f32.mxu0 0.0
        %630 = vmatmul.mubr.f32.gmra.mxu0 %v563
        %v631 = vpop.f32.mrf.mxu0
        %v632 = vadd.f32 %v532, %v631
        %v633 = vpop.f32.mrf.mxu0
        %634 = vdwg.mxu0
        %vm635 = vcmp.gt.f32.partialorder %v632, 0.0
        %v636 = vmul.f32 %v632, 0.01
        %v637 = vsel %vm635, %v632, %v636
        %638 = vst [vmem:[%s238] sm:$0xff] %v637
        %s639 = smul.u32 %s26, 8
        %s640 = sld [smem:[#allocation4 + %s639]]
        %s641 = scalar_lea.vmem [#allocation2], %s640
        %642 = vst [vmem:[%s641] sm:$0x1] %v637
        %s643 = sadd.s32 %s639, 1
        %s644 = sld [smem:[#allocation4 + %s643]]
        %s645 = scalar_lea.vmem [#allocation2], %s644
        %646 = vst [vmem:[%s645 - $0x1] sm:$0x2] %v637
        %s647 = sadd.s32 %s639, 2
        %s648 = sld [smem:[#allocation4 + %s647]]
        %s649 = scalar_lea.vmem [#allocation2], %s648
        %650 = vst [vmem:[%s649 - $0x2] sm:$0x4] %v637
        %s651 = sadd.s32 %s639, 3
        %s652 = sld [smem:[#allocation4 + %s651]]
        %s653 = scalar_lea.vmem [#allocation2], %s652
        %654 = vst [vmem:[%s653 - $0x3] sm:$0x8] %v637
        %s655 = sadd.s32 %s639, 4
        %s656 = sld [smem:[#allocation4 + %s655]]
        %s657 = scalar_lea.vmem [#allocation2], %s656
        %658 = vst [vmem:[%s657 - $0x4] sm:$0x10] %v637
        %s659 = sadd.s32 %s639, 5
        %s660 = sld [smem:[#allocation4 + %s659]]
        %s661 = scalar_lea.vmem [#allocation2], %s660
        %662 = vst [vmem:[%s661 - $0x5] sm:$0x20] %v637
        %s663 = sadd.s32 %s639, 6
        %s664 = sld [smem:[#allocation4 + %s663]]
        %s665 = scalar_lea.vmem [#allocation2], %s664
        %666 = vst [vmem:[%s665 - $0x6] sm:$0x40] %v637
        %s667 = sadd.s32 %s639, 7
        %s668 = sld [smem:[#allocation4 + %s667]]
        %s669 = scalar_lea.vmem [#allocation2], %s668
        %670 = vst [vmem:[%s669 - $0x7] sm:$0x80] %v637
        %s671 = sand.u32 %s149, 1
        %s672 = scalar_lea.sflag [#allocation6], %s671
        %s673 = sand.u32 %s149, 1
        %s674 = smul.addr %s673, 8
        %s675 = scalar_lea.vmem [#allocation5], %s674
        // Predicated region
        $region45: #{_fused_tree_encode.1} parent=39 // pred_check
          %p676 = pneg %p159
        $region46: #{_fused_tree_encode.1} parent=39 // pred_check_branch
          %678 = sbr.rel (%p676) target = $region48
        $region47: #{_fused_tree_encode.1} parent=39 // pred_region
          %s680 = ssub.s32 128, 128
          %681 = vsyncadd %s672, %s680
          %s682 = smul.addr %s26, 128
          %s683 = scalar_lea.hbm %s6, %s682
          %s685 = sshll.u32 %s675, 4
          %s686 = int_to_ptr.vmem [resolvable:$true] %s685
          %688 = dma.vmem_to_hbm [thread:$0]  %s686, 128, %s683, %s672
        $region48: #{_fused_tree_encode.1} parent=39 // pred_fallthru
          _
      $region40: #{_fused_tree_encode.1} parent=5 // pred_fallthru
        _
      %p689 = scmp.le.s32.totalorder 2, %s21
      // Predicated region
      $region49: #{_fused_tree_encode.1} parent=5 // pred_check
        %p690 = pneg %p689
      $region50: #{_fused_tree_encode.1} parent=5 // pred_check_branch
        %692 = sbr.rel (%p690) target = $region52
      $region51: #{_fused_tree_encode.1} parent=5 // pred_region
        %s693 = ssub.s32 %s21, 2
        // Predicated region
        $region53: #{_fused_tree_encode.1} parent=51 // pred_check
          %p694 = pneg %p165
        $region54: #{_fused_tree_encode.1} parent=51 // pred_check_branch
          %696 = sbr.rel (%p694) target = $region56
        $region55: #{_fused_tree_encode.1} parent=51 // pred_region
          %s697 = sand.u32 %s150, 1
          %s698 = scalar_lea.sflag [#allocation6], %s697
          %s699 = sand.u32 %s150, 1
          %s700 = smul.addr %s699, 8
          %s701 = scalar_lea.vmem [#allocation5], %s700
          %702 = dma.done %s698, 128
        $region56: #{_fused_tree_encode.1} parent=51 // pred_fallthru
          _
      $region52: #{_fused_tree_encode.1} parent=5 // pred_fallthru
        _
    $region6: #{_fused_tree_encode.1} parent=1 // loop_footer
      %s25 = sadd.s32 1, %s21
    $region7: #{_fused_tree_encode.1} parent=1 // loop_footer_branch
      %20 = sbr.rel target = $region3
    $region8: #{_fused_tree_encode.1} parent=1 // loop_exit
      _
    %703 = vsyncpa [#allocation6], 1
    %s704 = scalar_lea.sflag [#allocation6], 1
    %705 = vsyncpa %s704, 1

</llo_original>
